<compile_context>
chip_gen: v7x
topology: tpu7x:2x2x1
jax: 0.10.0
libtpu: 0.0.40
codegen_flags: <defaults>
</compile_context>

<pallas_src>
import math

import jax
import jax.numpy as jnp
import numpy as np
from jax import lax
from jax.experimental import pallas as pl
from jax.experimental.pallas import tpu as pltpu

_INV_SQRT2 = 1.0 / math.sqrt(2.0)


# ------------------- fused experts + weighted combine kernel ---------------- #
def _fused_expert_kernel(x_ref, w1_ref, b1_ref, w2_ref, scale_ref, b2c_ref, out_ref):
    # x_ref     (TB, D)      bf16
    # w1_ref    (D, E*H)     bf16   -- all experts' first layers, column-blocked
    # b1_ref    (1, E*H)     f32
    # w2_ref    (E*H, Opad)  bf16   -- all experts' second layers, row-stacked
    # scale_ref (TB, E*H)    f32    -- combine weight broadcast across each H block
    # b2c_ref   (TB, Opad)   f32    -- precomputed combine @ b2 (zero-padded)
    # out_ref   (TB, Opad)   f32
    h = jnp.dot(x_ref[...], w1_ref[...], preferred_element_type=jnp.float32)
    h = h + b1_ref[...]
    # exact (erf) GELU, matching torch.nn.GELU() default
    h = 0.5 * h * (1.0 + lax.erf(h * _INV_SQRT2))
    # weighted combine folded into the second matmul:
    #   sum_e c_e * (g_e @ W2_e) == concat_e(c_e * g_e) @ vstack_e(W2_e)
    hs = (h * scale_ref[...]).astype(jnp.bfloat16)
    out_ref[...] = (
        jnp.dot(hs, w2_ref[...], preferred_element_type=jnp.float32) + b2c_ref[...]
    )


def expert_combine(x, w1_t, b1, w2_t, b2, combine, *, batch_tile=128):
    """All-expert MLP + capacity-masked weighted combine in one pallas_call.

    x:       (B, D) activations
    w1_t:    (E, D, H) pre-transposed first-layer weights
    b1:      (E, H)
    w2_t:    (E, H, O) pre-transposed second-layer weights
    b2:      (E, O)
    combine: (B, E) routing weight per (token, expert), zero if not routed /
             over capacity.
    """
    B, D = x.shape
    E, _, H = w1_t.shape
    O = w2_t.shape[2]
    EH = E * H
    Opad = ((O + 127) // 128) * 128          # lane-dense output stores

    TB = min(B, batch_tile)
    assert B % TB == 0, "toy wrapper: batch must divide the batch tile"
    nb = B // TB

    # Fuse the expert weights (layout plumbing, done once outside the kernel).
    w1_f = jnp.transpose(w1_t, (1, 0, 2)).reshape(D, EH).astype(jnp.bfloat16)
    b1_f = b1.reshape(1, EH).astype(jnp.float32)
    w2_f = w2_t.reshape(EH, O).astype(jnp.bfloat16)
    w2_f = jnp.pad(w2_f, ((0, 0), (0, Opad - O)))
    # Per-token routing weight expanded over each expert's H-wide block.
    scale = jnp.repeat(combine.astype(jnp.float32), H, axis=1)          # (B, EH)
    # Bias term: sum_e c_e * b2_e  ==  combine @ b2  (tiny, done in XLA).
    b2c = jnp.pad(combine @ b2.astype(jnp.float32), ((0, 0), (0, Opad - O)))
    x_bf = x.astype(jnp.bfloat16)

    out = pl.pallas_call(
        _fused_expert_kernel,
        out_shape=jax.ShapeDtypeStruct((B, Opad), jnp.float32),
        grid=(nb,),
        in_specs=[
            pl.BlockSpec((TB, D), lambda i: (i, 0)),
            pl.BlockSpec((D, EH), lambda i: (0, 0)),
            pl.BlockSpec((1, EH), lambda i: (0, 0)),
            pl.BlockSpec((EH, Opad), lambda i: (0, 0)),
            pl.BlockSpec((TB, EH), lambda i: (i, 0)),
            pl.BlockSpec((TB, Opad), lambda i: (i, 0)),
        ],
        out_specs=pl.BlockSpec((TB, Opad), lambda i: (i, 0)),
        compiler_params=pltpu.CompilerParams(
            # batch tiles are independent -> shardable across v7x's 2 TCs
            dimension_semantics=("parallel",)),
    )(x_bf, w1_f, b1_f, w2_f, scale, b2c)
    return out[:, :O]


# ------------------------------ MoE forward -------------------------------- #
def moe_forward(params, x, *, top_k, expert_capacity, training=True):
    wg_t, bg, w1_t, b1, w2_t, b2 = params
    B = x.shape[0]
    E = wg_t.shape[1]

    # Gate: tiny (B,D)x(D,E) matmul + softmax — left to XLA (see header note).
    logits = x @ wg_t + bg
    prob = jax.nn.softmax(logits, axis=-1)                  # (B, E) f32
    top_k_prob, top_k_idx = lax.top_k(prob, top_k)          # (B, K)

    # Capacity: per expert, keep only the first `expert_capacity` assignments
    # in flattened (batch, top_k) order — matches torch's boolean-mask gather.
    flat_idx = top_k_idx.reshape(-1)                        # (B*K,)
    flat_prob = top_k_prob.reshape(-1)                      # (B*K,)
    onehot = flat_idx[:, None] == jnp.arange(E)[None, :]    # (B*K, E)
    pos = jnp.cumsum(onehot.astype(jnp.int32), axis=0)
    keep = onehot & (pos <= expert_capacity)
    combine = (keep.astype(jnp.float32) * flat_prob[:, None]
               ).reshape(B, top_k, E).sum(axis=1)           # (B, E)

    out = expert_combine(x, w1_t, b1, w2_t, b2, combine)    # (B, O), Pallas

    if training:  # nn.Module defaults to training=True
        importance = prob.sum(0)
        importance_loss = jnp.var(importance, ddof=1) / (E ** 2)  # torch unbiased var
        mask = onehot.reshape(B, top_k, E).any(axis=1)
        routing_probs = prob * mask
        expert_usage = mask.astype(jnp.float32).mean(0)
        routing_weights = routing_probs.mean(0)
        load_balance_loss = E * jnp.sum(expert_usage * routing_weights)
        aux_loss = importance_loss + load_balance_loss
    else:
        aux_loss = jnp.float32(0.0)
    # TODO(synk): the per-sample Chinese debug print ("第三个batch...") is a
    # host-side data-dependent print with no kernel equivalent; omitted.
    return out, aux_loss


# ------------------------- pure-JAX reference check ------------------------ #
def moe_reference(params, x, *, top_k, expert_capacity):
    """Straight f32 per-expert translation of the torch module (semantics ref)."""
    wg_t, bg, w1_t, b1, w2_t, b2 = params
    B = x.shape[0]
    E = wg_t.shape[1]
    logits = x @ wg_t + bg
    prob = jax.nn.softmax(logits, axis=-1)
    top_k_prob, top_k_idx = lax.top_k(prob, top_k)
    flat_idx = top_k_idx.reshape(-1)
    flat_prob = top_k_prob.reshape(-1)
    onehot = flat_idx[:, None] == jnp.arange(E)[None, :]
    pos = jnp.cumsum(onehot.astype(jnp.int32), axis=0)
    keep = onehot & (pos <= expert_capacity)
    combine = (keep.astype(jnp.float32) * flat_prob[:, None]
               ).reshape(B, top_k, E).sum(axis=1)
    out = jnp.zeros((B, w2_t.shape[2]), jnp.float32)
    for e in range(E):
        h = x @ w1_t[e] + b1[e]
        h = 0.5 * h * (1.0 + lax.erf(h * _INV_SQRT2))
        y = h @ w2_t[e] + b2[e]
        out = out + combine[:, e:e + 1] * y
    return out


# ----------------------------------- main ----------------------------------- #
if __name__ == "__main__":
    B, D, H, O = 8, 32, 64, 32
    E, K, CAP = 4, 2, 3

    key = jax.random.PRNGKey(0)
    ks = jax.random.split(key, 7)
    x = jax.random.normal(ks[0], (B, D), jnp.float32)
    wg_t = jax.random.normal(ks[1], (D, E), jnp.float32) * (1.0 / math.sqrt(D))
    bg = jax.random.normal(ks[2], (E,), jnp.float32) * 0.01
    w1_t = jax.random.normal(ks[3], (E, D, H), jnp.float32) * (1.0 / math.sqrt(D))
    b1 = jax.random.normal(ks[4], (E, H), jnp.float32) * 0.01
    w2_t = jax.random.normal(ks[5], (E, H, O), jnp.float32) * (1.0 / math.sqrt(H))
    b2 = jax.random.normal(ks[6], (E, O), jnp.float32) * 0.01
    params = (wg_t, bg, w1_t, b1, w2_t, b2)

    out, aux = moe_forward(params, x, top_k=K, expert_capacity=CAP, training=True)
    out = jax.block_until_ready(out)
    aux = jax.block_until_ready(aux)

    ref = moe_reference(params, x, top_k=K, expert_capacity=CAP)
    # bf16 MXU operands vs f32 reference -> loosened tolerance (per review).
    np.testing.assert_allclose(np.asarray(out), np.asarray(ref), rtol=5e-2, atol=5e-2)
    assert np.isfinite(float(aux))

    print("KERNEL_OK")
</pallas_src>

<mosaic_0001>
module attributes {stable_mosaic.version = 11 : i64} {
  func.func @_fused_expert_kernel(%arg0: i32, %arg1: memref<8x32xbf16, #tpu.memory_space<vmem>>, %arg2: memref<32x256xbf16, #tpu.memory_space<vmem>>, %arg3: memref<1x256xf32, #tpu.memory_space<vmem>>, %arg4: memref<256x128xbf16, #tpu.memory_space<vmem>>, %arg5: memref<8x256xf32, #tpu.memory_space<vmem>>, %arg6: memref<8x128xf32, #tpu.memory_space<vmem>>, %arg7: memref<8x128xf32, #tpu.memory_space<vmem>>) attributes {dimension_semantics = [#tpu.dimension_semantics<parallel>], iteration_bounds = array<i64: 1>, scalar_prefetch = 0 : i64, scratch_operands = 0 : i64, tpu.core_type = #tpu.core_type<tc>, window_params = [{transform_indices = @transform_0, window_bounds = array<i64: 8, 32>}, {pipeline_mode = #tpu.pipeline_mode<synchronous>, transform_indices = @transform_1, window_bounds = array<i64: 32, 256>}, {pipeline_mode = #tpu.pipeline_mode<synchronous>, transform_indices = @transform_2, window_bounds = array<i64: 1, 256>}, {pipeline_mode = #tpu.pipeline_mode<synchronous>, transform_indices = @transform_3, window_bounds = array<i64: 256, 128>}, {transform_indices = @transform_4, window_bounds = array<i64: 8, 256>}, {transform_indices = @transform_5, window_bounds = array<i64: 8, 128>}, {transform_indices = @transform_6, window_bounds = array<i64: 8, 128>}]} {
    %c0 = arith.constant 0 : index
    %c0_0 = arith.constant 0 : index
    %0 = vector.load %arg1[%c0, %c0_0] : memref<8x32xbf16, #tpu.memory_space<vmem>>, vector<8x32xbf16>
    %c0_1 = arith.constant 0 : index
    %c0_2 = arith.constant 0 : index
    %1 = vector.load %arg2[%c0_1, %c0_2] : memref<32x256xbf16, #tpu.memory_space<vmem>>, vector<32x256xbf16>
    %cst = arith.constant dense<0.000000e+00> : vector<8x256xf32>
    %2 = tpu.matmul %0, %1, %cst {dimension_numbers = #tpu.dot_dimension_numbers<[1], [0], [0], [1], [0, 0, 1, 1], [], []>} : vector<8x32xbf16>, vector<32x256xbf16>, vector<8x256xf32> -> vector<8x256xf32>
    %c0_3 = arith.constant 0 : index
    %c0_4 = arith.constant 0 : index
    %3 = vector.load %arg3[%c0_3, %c0_4] : memref<1x256xf32, #tpu.memory_space<vmem>>, vector<1x256xf32>
    %4 = vector.broadcast %3 : vector<1x256xf32> to vector<8x256xf32>
    %5 = arith.addf %2, %4 : vector<8x256xf32>
    %cst_5 = arith.constant 5.000000e-01 : f32
    %6 = vector.broadcast %cst_5 : f32 to vector<8x256xf32>
    %7 = arith.mulf %6, %5 : vector<8x256xf32>
    %cst_6 = arith.constant 0.707106769 : f32
    %8 = vector.broadcast %cst_6 : f32 to vector<8x256xf32>
    %9 = arith.mulf %5, %8 : vector<8x256xf32>
    %10 = math.erf %9 : vector<8x256xf32>
    %cst_7 = arith.constant 1.000000e+00 : f32
    %11 = vector.broadcast %cst_7 : f32 to vector<8x256xf32>
    %12 = arith.addf %11, %10 : vector<8x256xf32>
    %13 = arith.mulf %7, %12 : vector<8x256xf32>
    %c0_8 = arith.constant 0 : index
    %c0_9 = arith.constant 0 : index
    %14 = vector.load %arg5[%c0_8, %c0_9] : memref<8x256xf32, #tpu.memory_space<vmem>>, vector<8x256xf32>
    %15 = arith.mulf %13, %14 : vector<8x256xf32>
    %16 = arith.truncf %15 : vector<8x256xf32> to vector<8x256xbf16>
    %c0_10 = arith.constant 0 : index
    %c0_11 = arith.constant 0 : index
    %17 = vector.load %arg4[%c0_10, %c0_11] : memref<256x128xbf16, #tpu.memory_space<vmem>>, vector<256x128xbf16>
    %cst_12 = arith.constant dense<0.000000e+00> : vector<8x128xf32>
    %18 = tpu.matmul %16, %17, %cst_12 {dimension_numbers = #tpu.dot_dimension_numbers<[1], [0], [0], [1], [0, 0, 1, 1], [], []>} : vector<8x256xbf16>, vector<256x128xbf16>, vector<8x128xf32> -> vector<8x128xf32>
    %c0_13 = arith.constant 0 : index
    %c0_14 = arith.constant 0 : index
    %19 = vector.load %arg6[%c0_13, %c0_14] : memref<8x128xf32, #tpu.memory_space<vmem>>, vector<8x128xf32>
    %20 = arith.addf %18, %19 : vector<8x128xf32>
    %c0_15 = arith.constant 0 : index
    %c0_16 = arith.constant 0 : index
    %21 = vector.load %arg7[%c0_15, %c0_16] : memref<8x128xf32, #tpu.memory_space<vmem>>, vector<8x128xf32>
    tpu.vector_store %arg7[%c0_15, %c0_16], %20 {strides = array<i32>} : memref<8x128xf32, #tpu.memory_space<vmem>>, vector<8x128xf32>,
    return
  }
  func.func @transform_0(%arg0: i32) -> (i32, i32) {
    %c0_i32 = arith.constant 0 : i32
    %c0_i32_0 = arith.constant 0 : i32
    return %arg0, %c0_i32 : i32, i32
  }
  func.func @transform_1(%arg0: i32) -> (i32, i32) {
    %c0_i32 = arith.constant 0 : i32
    %c0_i32_0 = arith.constant 0 : i32
    %c0_i32_1 = arith.constant 0 : i32
    return %c0_i32, %c0_i32_0 : i32, i32
  }
  func.func @transform_2(%arg0: i32) -> (i32, i32) {
    %c0_i32 = arith.constant 0 : i32
    %c0_i32_0 = arith.constant 0 : i32
    %c0_i32_1 = arith.constant 0 : i32
    return %c0_i32, %c0_i32_0 : i32, i32
  }
  func.func @transform_3(%arg0: i32) -> (i32, i32) {
    %c0_i32 = arith.constant 0 : i32
    %c0_i32_0 = arith.constant 0 : i32
    %c0_i32_1 = arith.constant 0 : i32
    return %c0_i32, %c0_i32_0 : i32, i32
  }
  func.func @transform_4(%arg0: i32) -> (i32, i32) {
    %c0_i32 = arith.constant 0 : i32
    %c0_i32_0 = arith.constant 0 : i32
    return %arg0, %c0_i32 : i32, i32
  }
  func.func @transform_5(%arg0: i32) -> (i32, i32) {
    %c0_i32 = arith.constant 0 : i32
    %c0_i32_0 = arith.constant 0 : i32
    return %arg0, %c0_i32 : i32, i32
  }
  func.func @transform_6(%arg0: i32) -> (i32, i32) {
    %c0_i32 = arith.constant 0 : i32
    %c0_i32_0 = arith.constant 0 : i32
    return %arg0, %c0_i32 : i32, i32
  }
}

</mosaic_0001>

<llo_original>
// kernel: tpu_custom_call.1
$region0: #{tpu_custom_call.1}
  #allocation0 [shape = 'u32[]', space=smem, size = 0x4, offset = 0x4, fixed_abs, tag = 'smem constant byte address 0x4 - core index']
  #allocation1 [shape = 'u32[144,128]{1,0:T(1,128)}', space=vmem, size = 0x12000, scoped, tag = 'internal scratch']
  %s0 = inlined_call_operand.hbm [shape: bf16[8,32], index: 0, kind: input, shape index: {}]
  %s1 = inlined_call_operand.hbm [shape: bf16[32,256], index: 1, kind: input, shape index: {}]
  %s2 = inlined_call_operand.vmem [shape: f32[1,256], index: 2, kind: input, shape index: {}]
  %s3 = inlined_call_operand.hbm [shape: bf16[256,128], index: 3, kind: input, shape index: {}]
  %s4 = inlined_call_operand.hbm [shape: f32[8,256], index: 4, kind: input, shape index: {}]
  %s5 = inlined_call_operand.vmem [shape: f32[8,128], index: 5, kind: input, shape index: {}]
  %s6 = inlined_call_operand.hbm [shape: f32[8,128], index: 6, kind: output, shape index: {}]
  %s7 = sld [smem:[#allocation0]]
  $region50: #{tpu_custom_call.1} parent=0
    _
  %s9 = ssub.s32 1, %s7
  %s10 = scalar_select 0, %s9, %s7
  $region1: #{tpu_custom_call.1} parent=0
    #allocation2 [shape = 'u8[2048]{0}', space=vmem, size = 0x800, scoped, tag = 'input window, operand 0, single buffered']
    #allocation3 [shape = 's32[1]{0}', space=sflag, size = 0x4, scoped, tag = 'scoped memory for tpu_custom_call.1']
    #allocation4 [shape = 's32[1]{0}', space=sflag, size = 0x4, scoped, tag = 'scoped memory for tpu_custom_call.1']
    #allocation5 [shape = 'u8[16384]{0}', space=vmem, size = 0x4000, scoped, tag = 'input window, operand 1, single buffered']
    #allocation6 [shape = 's32[1]{0}', space=sflag, size = 0x4, scoped, tag = 'scoped memory for tpu_custom_call.1']
    #allocation7 [shape = 'u8[65536]{0}', space=vmem, size = 0x10000, scoped, tag = 'input window, operand 3, single buffered']
    #allocation8 [shape = 'u8[8192]{0}', space=vmem, size = 0x2000, scoped, tag = 'input window, operand 4, single buffered']
    #allocation9 [shape = 's32[1]{0}', space=sflag, size = 0x4, scoped, tag = 'scoped memory for tpu_custom_call.1']
    #allocation10 [shape = 'u8[4096]{0}', space=vmem, size = 0x1000, scoped, tag = 'output window, operand 0, single buffered']
    %11 = vsyncpa [#allocation3], 0
    %12 = vsyncpa [#allocation6], 0
    %13 = vsyncpa [#allocation9], 0
    %14 = vsyncpa [#allocation4], 0
    // Predicated region
    $region2: #{tpu_custom_call.1} parent=1 // pred_check
      _
    $region3: #{tpu_custom_call.1} parent=1 // pred_check_branch
      %16 = sbr.rel (0) target = $region5
    $region4: #{tpu_custom_call.1} parent=1 // pred_region
      %s18 = ssub.s32 64, 64
      %19 = vsyncadd [#allocation3], %s18
      %s21 = sshll.u32 [#allocation2], 4
      %s22 = int_to_ptr.vmem [resolvable:$true] %s21
      %24 = dma.hbm_to_vmem [thread:$0]  %s0, 64, %s22, [#allocation3]
    $region5: #{tpu_custom_call.1} parent=1 // pred_fallthru
      _
    // Predicated region
    $region6: #{tpu_custom_call.1} parent=1 // pred_check
      _
    $region7: #{tpu_custom_call.1} parent=1 // pred_check_branch
      %26 = sbr.rel (0) target = $region9
    $region8: #{tpu_custom_call.1} parent=1 // pred_region
      %s28 = ssub.s32 512, 512
      %29 = vsyncadd [#allocation6], %s28
      %s30 = sshll.u32 [#allocation5], 4
      %s31 = int_to_ptr.vmem [resolvable:$true] %s30
      %36 = dma.hbm_to_vmem [thread:$0]  %s1, 512, %s31, [#allocation6], 128, 128, 8
    $region9: #{tpu_custom_call.1} parent=1 // pred_fallthru
      _
    // Predicated region
    $region10: #{tpu_custom_call.1} parent=1 // pred_check
      _
    $region11: #{tpu_custom_call.1} parent=1 // pred_check_branch
      %38 = sbr.rel (0) target = $region13
    $region12: #{tpu_custom_call.1} parent=1 // pred_region
      _
    $region13: #{tpu_custom_call.1} parent=1 // pred_fallthru
      _
    // Predicated region
    $region14: #{tpu_custom_call.1} parent=1 // pred_check
      _
    $region15: #{tpu_custom_call.1} parent=1 // pred_check_branch
      %40 = sbr.rel (0) target = $region17
    $region16: #{tpu_custom_call.1} parent=1 // pred_region
      %s42 = ssub.s32 2048, 2048
      %43 = vsyncadd [#allocation6], %s42
      %s44 = sshll.u32 [#allocation7], 4
      %s45 = int_to_ptr.vmem [resolvable:$true] %s44
      %50 = dma.hbm_to_vmem [thread:$0]  %s3, 2048, %s45, [#allocation6], 64, 64, 4
    $region17: #{tpu_custom_call.1} parent=1 // pred_fallthru
      _
    // Predicated region
    $region18: #{tpu_custom_call.1} parent=1 // pred_check
      _
    $region19: #{tpu_custom_call.1} parent=1 // pred_check_branch
      %52 = sbr.rel (0) target = $region21
    $region20: #{tpu_custom_call.1} parent=1 // pred_region
      %s54 = ssub.s32 256, 256
      %55 = vsyncadd [#allocation9], %s54
      %s57 = sshll.u32 [#allocation8], 4
      %s58 = int_to_ptr.vmem [resolvable:$true] %s57
      %60 = dma.hbm_to_vmem [thread:$0]  %s4, 256, %s58, [#allocation9]
    $region21: #{tpu_custom_call.1} parent=1 // pred_fallthru
      _
    // Predicated region
    $region22: #{tpu_custom_call.1} parent=1 // pred_check
      _
    $region23: #{tpu_custom_call.1} parent=1 // pred_check_branch
      %62 = sbr.rel (0) target = $region25
    $region24: #{tpu_custom_call.1} parent=1 // pred_region
      _
    $region25: #{tpu_custom_call.1} parent=1 // pred_fallthru
      _
    // Predicated region
    $region26: #{tpu_custom_call.1} parent=1 // pred_check
      _
    $region27: #{tpu_custom_call.1} parent=1 // pred_check_branch
      %64 = sbr.rel (0) target = $region29
    $region28: #{tpu_custom_call.1} parent=1 // pred_region
      %65 = dma.done [#allocation3], 64
    $region29: #{tpu_custom_call.1} parent=1 // pred_fallthru
      _
    // Predicated region
    $region30: #{tpu_custom_call.1} parent=1 // pred_check
      _
    $region31: #{tpu_custom_call.1} parent=1 // pred_check_branch
      %67 = sbr.rel (0) target = $region33
    $region32: #{tpu_custom_call.1} parent=1 // pred_region
      %68 = dma.done [#allocation6], 512
    $region33: #{tpu_custom_call.1} parent=1 // pred_fallthru
      _
    // Predicated region
    $region34: #{tpu_custom_call.1} parent=1 // pred_check
      _
    $region35: #{tpu_custom_call.1} parent=1 // pred_check_branch
      %70 = sbr.rel (0) target = $region37
    $region36: #{tpu_custom_call.1} parent=1 // pred_region
      %71 = dma.done [#allocation6], 2048
    $region37: #{tpu_custom_call.1} parent=1 // pred_fallthru
      _
    // Predicated region
    $region38: #{tpu_custom_call.1} parent=1 // pred_check
      _
    $region39: #{tpu_custom_call.1} parent=1 // pred_check_branch
      %73 = sbr.rel (0) target = $region41
    $region40: #{tpu_custom_call.1} parent=1 // pred_region
      %74 = dma.done [#allocation9], 256
    $region41: #{tpu_custom_call.1} parent=1 // pred_fallthru
      _
    %v76 = vld [vmem:[#allocation2] sm:$0xf]
    %v77 = vld [vmem:[#allocation5] sm:$0xff]
    %v78 = vld [vmem:[#allocation5 + $0x8] sm:$0xff]
    %v79 = vld [vmem:[#allocation5 + $0x10] sm:$0xff]
    %v80 = vld [vmem:[#allocation5 + $0x18] sm:$0xff]
    %v81 = vld [vmem:[%s2] sm:$0x3]
    %v83 = vlaneseq
    %v84 = vshrl.u32 %v83, 7
    %v85 = vsub.s32 0, %v84
    %v86 = vrot.slane %v81, %v85
    %v87 = vlaneseq
    %v88 = vshrl.u32 %v87, 7
    %v89 = vsub.s32 1, %v88
    %v90 = vrot.slane %v81, %v89
    %v97 = vunpack.c.l.b16 %v77
    %v98 = vunpack.c.h.b16 %v77
    %v99 = vunpack.c.l.b16 %v78
    %v100 = vunpack.c.h.b16 %v78
    %v101 = vunpack.c.l.b16 %v79
    %v102 = vunpack.c.h.b16 %v79
    %v103 = vunpack.c.l.b16 %v80
    %v104 = vunpack.c.h.b16 %v80
    %v105 = vpack.c.b16 %v99, %v97
    %v106 = vpack.c.b16 %v100, %v98
    %v107 = vpack.c.b16 %v103, %v101
    %v108 = vpack.c.b16 %v104, %v102
    %vm113 = vcmask 261120
    %v115 = vsel %vm113, %v76, 0
    %117 = vmatprep.subr.bf16.mxu0 %v106
    %118 = vmatpush1.bf16.msra.mxu0 %v105
    %119 = vmatprep.subr.bf16.mxu0 %v108
    %120 = vmatpush1.bf16.msra.mxu0 %v107
    %121 = vmatprep.subr.bf16.mxu0 0
    %122 = vmatpush1.bf16.msra.mxu0 0
    %123 = vmatprep.subr.bf16.mxu0 0
    %124 = vmatpush1.bf16.msra.mxu0 0
    %125 = vmatprep.subr.bf16.mxu0 0
    %126 = vmatpush1.bf16.msra.mxu0 0
    %127 = vmatprep.subr.bf16.mxu0 0
    %128 = vmatpush1.bf16.msra.mxu0 0
    %129 = vmatprep.subr.bf16.mxu0 0
    %130 = vmatpush1.bf16.msra.mxu0 0
    %131 = vmatprep.subr.bf16.mxu0 0
    %132 = vmatpush1.bf16.msra.mxu0 0
    %133 = vmatprep.subr.bf16.mxu0 0
    %134 = vmatpush1.bf16.msra.mxu0 0
    %135 = vmatprep.subr.bf16.mxu0 0
    %136 = vmatpush1.bf16.msra.mxu0 0
    %137 = vmatprep.subr.bf16.mxu0 0
    %138 = vmatpush1.bf16.msra.mxu0 0
    %139 = vmatprep.subr.bf16.mxu0 0
    %140 = vmatpush1.bf16.msra.mxu0 0
    %141 = vmatprep.subr.bf16.mxu0 0
    %142 = vmatpush1.bf16.msra.mxu0 0
    %143 = vmatprep.subr.bf16.mxu0 0
    %144 = vmatpush1.bf16.msra.mxu0 0
    %145 = vmatprep.subr.bf16.mxu0 0
    %146 = vmatpush1.bf16.msra.mxu0 0
    %147 = vmatprep.subr.bf16.mxu0 0
    %148 = vmatpush1.bf16.msra.mxu0 0
    %149 = vmatprep.mubr.bf16.mxu0 0
    %150 = vmatmul.mubr.bf16.gmra.mrb[0].mxu0 %v115
    %v151 = vpop.f32.mrb[0].mxu0
    %v152 = vadd.f32 %v86, %v151
    %v153 = vpop.f32.mrb[0].mxu0
    %v154 = vadd.f32 %v90, %v153
    %v155 = vpop.f32.mrb[0].mxu0
    %v156 = vpop.f32.mrb[0].mxu0
    %157 = vdwg.mxu0
    %v158 = vmul.f32 %v152, 0.5
    %v159 = vmul.f32 %v154, 0.5
    %v160 = vmul.f32 %v152, 0.70710677
    %v161 = vmul.f32 %v154, 0.70710677
    %v162 = verf.f32.pop %v160
    %v163 = verf.f32.pop %v161
    %v164 = vadd.f32 %v162, 1.0
    %v165 = vadd.f32 %v163, 1.0
    %v166 = vmul.f32 %v158, %v164
    %v167 = vmul.f32 %v159, %v165
    %v168 = vld [vmem:[#allocation8] sm:$0xff]
    %v169 = vld [vmem:[#allocation8 + $0x8] sm:$0xff]
    %v170 = vmul.f32 %v166, %v168
    %v171 = vmul.f32 %v167, %v169
    %v172 = vpack.c.bf16 %v170, %v170
    %v173 = vpack.c.bf16 %v171, %v171
    %v174 = vld [vmem:[#allocation7] sm:$0xf]
    %v175 = vld [vmem:[#allocation7 + $0x4] sm:$0xf]
    %v176 = vld [vmem:[#allocation7 + $0x8] sm:$0xf]
    %v177 = vld [vmem:[#allocation7 + $0xc] sm:$0xf]
    %v178 = vld [vmem:[#allocation7 + $0x10] sm:$0xf]
    %v179 = vld [vmem:[#allocation7 + $0x14] sm:$0xf]
    %v180 = vld [vmem:[#allocation7 + $0x18] sm:$0xf]
    %v181 = vld [vmem:[#allocation7 + $0x1c] sm:$0xf]
    %v182 = vld [vmem:[#allocation7 + $0x20] sm:$0xf]
    %v183 = vld [vmem:[#allocation7 + $0x24] sm:$0xf]
    %v184 = vld [vmem:[#allocation7 + $0x28] sm:$0xf]
    %v185 = vld [vmem:[#allocation7 + $0x2c] sm:$0xf]
    %v186 = vld [vmem:[#allocation7 + $0x30] sm:$0xf]
    %v187 = vld [vmem:[#allocation7 + $0x34] sm:$0xf]
    %v188 = vld [vmem:[#allocation7 + $0x38] sm:$0xf]
    %v189 = vld [vmem:[#allocation7 + $0x3c] sm:$0xf]
    %v190 = vld [vmem:[#allocation7 + $0x40] sm:$0xf]
    %v191 = vld [vmem:[#allocation7 + $0x44] sm:$0xf]
    %v192 = vld [vmem:[#allocation7 + $0x48] sm:$0xf]
    %v193 = vld [vmem:[#allocation7 + $0x4c] sm:$0xf]
    %v194 = vld [vmem:[#allocation7 + $0x50] sm:$0xf]
    %v195 = vld [vmem:[#allocation7 + $0x54] sm:$0xf]
    %v196 = vld [vmem:[#allocation7 + $0x58] sm:$0xf]
    %v197 = vld [vmem:[#allocation7 + $0x5c] sm:$0xf]
    %v198 = vld [vmem:[#allocation7 + $0x60] sm:$0xf]
    %v199 = vld [vmem:[#allocation7 + $0x64] sm:$0xf]
    %v200 = vld [vmem:[#allocation7 + $0x68] sm:$0xf]
    %v201 = vld [vmem:[#allocation7 + $0x6c] sm:$0xf]
    %v202 = vld [vmem:[#allocation7 + $0x70] sm:$0xf]
    %v203 = vld [vmem:[#allocation7 + $0x74] sm:$0xf]
    %v204 = vld [vmem:[#allocation7 + $0x78] sm:$0xf]
    %v205 = vld [vmem:[#allocation7 + $0x7c] sm:$0xf]
    %v206 = vld [vmem:[%s5] sm:$0xff]
    %v239 = vunpack.c.l.b16 %v174
    %v240 = vunpack.c.l.b16 %v175
    %v241 = vunpack.c.l.b16 %v176
    %v242 = vunpack.c.l.b16 %v177
    %v243 = vunpack.c.l.b16 %v178
    %v244 = vunpack.c.l.b16 %v179
    %v245 = vunpack.c.l.b16 %v180
    %v246 = vunpack.c.l.b16 %v181
    %v247 = vunpack.c.l.b16 %v182
    %v248 = vunpack.c.l.b16 %v183
    %v249 = vunpack.c.l.b16 %v184
    %v250 = vunpack.c.l.b16 %v185
    %v251 = vunpack.c.l.b16 %v186
    %v252 = vunpack.c.l.b16 %v187
    %v253 = vunpack.c.l.b16 %v188
    %v254 = vunpack.c.l.b16 %v189
    %v255 = vunpack.c.l.b16 %v190
    %v256 = vunpack.c.l.b16 %v191
    %v257 = vunpack.c.l.b16 %v192
    %v258 = vunpack.c.l.b16 %v193
    %v259 = vunpack.c.l.b16 %v194
    %v260 = vunpack.c.l.b16 %v195
    %v261 = vunpack.c.l.b16 %v196
    %v262 = vunpack.c.l.b16 %v197
    %v263 = vunpack.c.l.b16 %v198
    %v264 = vunpack.c.l.b16 %v199
    %v265 = vunpack.c.l.b16 %v200
    %v266 = vunpack.c.l.b16 %v201
    %v267 = vunpack.c.l.b16 %v202
    %v268 = vunpack.c.l.b16 %v203
    %v269 = vunpack.c.l.b16 %v204
    %v270 = vunpack.c.l.b16 %v205
    %v271 = vpack.c.b16 %v240, %v239
    %v272 = vpack.c.b16 %v242, %v241
    %v273 = vpack.c.b16 %v244, %v243
    %v274 = vpack.c.b16 %v246, %v245
    %v275 = vpack.c.b16 %v248, %v247
    %v276 = vpack.c.b16 %v250, %v249
    %v277 = vpack.c.b16 %v252, %v251
    %v278 = vpack.c.b16 %v254, %v253
    %v279 = vpack.c.b16 %v256, %v255
    %v280 = vpack.c.b16 %v258, %v257
    %v281 = vpack.c.b16 %v260, %v259
    %v282 = vpack.c.b16 %v262, %v261
    %v283 = vpack.c.b16 %v264, %v263
    %v284 = vpack.c.b16 %v266, %v265
    %v285 = vpack.c.b16 %v268, %v267
    %v286 = vpack.c.b16 %v270, %v269
    %303 = vmatprep.subr.bf16.mxu0 0
    %304 = vmatpush1.bf16.msra.mxu0 %v271
    %305 = vmatprep.subr.bf16.mxu0 0
    %306 = vmatpush1.bf16.msra.mxu0 %v272
    %307 = vmatprep.subr.bf16.mxu0 0
    %308 = vmatpush1.bf16.msra.mxu0 %v273
    %309 = vmatprep.subr.bf16.mxu0 0
    %310 = vmatpush1.bf16.msra.mxu0 %v274
    %311 = vmatprep.subr.bf16.mxu0 0
    %312 = vmatpush1.bf16.msra.mxu0 %v275
    %313 = vmatprep.subr.bf16.mxu0 0
    %314 = vmatpush1.bf16.msra.mxu0 %v276
    %315 = vmatprep.subr.bf16.mxu0 0
    %316 = vmatpush1.bf16.msra.mxu0 %v277
    %317 = vmatprep.subr.bf16.mxu0 0
    %318 = vmatpush1.bf16.msra.mxu0 %v278
    %319 = vmatprep.subr.bf16.mxu0 0
    %320 = vmatpush1.bf16.msra.mxu0 %v279
    %321 = vmatprep.subr.bf16.mxu0 0
    %322 = vmatpush1.bf16.msra.mxu0 %v280
    %323 = vmatprep.subr.bf16.mxu0 0
    %324 = vmatpush1.bf16.msra.mxu0 %v281
    %325 = vmatprep.subr.bf16.mxu0 0
    %326 = vmatpush1.bf16.msra.mxu0 %v282
    %327 = vmatprep.subr.bf16.mxu0 0
    %328 = vmatpush1.bf16.msra.mxu0 %v283
    %329 = vmatprep.subr.bf16.mxu0 0
    %330 = vmatpush1.bf16.msra.mxu0 %v284
    %331 = vmatprep.subr.bf16.mxu0 0
    %332 = vmatpush1.bf16.msra.mxu0 %v285
    %333 = vmatprep.subr.bf16.mxu0 0
    %334 = vmatpush1.bf16.msra.mxu0 %v286
    %335 = vmatprep.mubr.bf16.mxu0 %v173
    %336 = vmatmul.mubr.bf16.gmra.mrb[0].mxu0 %v172
    %v337 = vpop.f32.mrb[0].mxu0
    %v338 = vadd.f32 %v206, %v337
    %v339 = vpop.f32.mrb[0].mxu0
    %v340 = vpop.f32.mrb[0].mxu0
    %v341 = vpop.f32.mrb[0].mxu0
    %342 = vdwg.mxu0
    %343 = vst [vmem:[#allocation10] sm:$0xff] %v338
    // Predicated region
    $region42: #{tpu_custom_call.1} parent=1 // pred_check
      _
    $region43: #{tpu_custom_call.1} parent=1 // pred_check_branch
      %345 = sbr.rel (0) target = $region45
    $region44: #{tpu_custom_call.1} parent=1 // pred_region
      %s347 = ssub.s32 128, 128
      %348 = vsyncadd [#allocation4], %s347
      %s350 = sshll.u32 [#allocation10], 4
      %s351 = int_to_ptr.vmem [resolvable:$true] %s350
      %353 = dma.vmem_to_hbm [thread:$0]  %s351, 128, %s6, [#allocation4]
    $region45: #{tpu_custom_call.1} parent=1 // pred_fallthru
      _
    // Predicated region
    $region46: #{tpu_custom_call.1} parent=1 // pred_check
      _
    $region47: #{tpu_custom_call.1} parent=1 // pred_check_branch
      %355 = sbr.rel (0) target = $region49
    $region48: #{tpu_custom_call.1} parent=1 // pred_region
      %356 = dma.done [#allocation4], 128
    $region49: #{tpu_custom_call.1} parent=1 // pred_fallthru
      _
    %357 = vsyncpa [#allocation3], 1
    %358 = vsyncpa [#allocation6], 1
    %359 = vsyncpa [#allocation9], 1
    %360 = vsyncpa [#allocation4], 1

</llo_original>
